<compile_context>
chip_gen: v7x
topology: tpu7x:2x2x1
jax: 0.10.0
libtpu: 0.0.40
codegen_flags: <defaults>
</compile_context>

<pallas_src>
import jax
import jax.numpy as jnp
from jax.experimental import pallas as pl
from jax.experimental.pallas import tpu as pltpu

Z_DIM = 64
HIDDEN = 256
IMG_DIM = 784  # 28*28, typical MNIST GAN output

LANE = 128
SUBLANE = 8


def _round_up(x, m):
    return ((x + m - 1) // m) * m


def generator_kernel(x_ref, w1_ref, b1_ref, w2_ref, b2_ref, o_ref):
    # Layer 1: bf16 operands on the MXU, f32 accumulation, f32 bias add.
    h = jnp.dot(x_ref[...].astype(jnp.bfloat16), w1_ref[...],
                preferred_element_type=jnp.float32) + b1_ref[...]
    # LeakyReLU(0.1) in f32 (VPU select slot).
    h = jnp.where(h > 0, h, 0.1 * h)
    # Layer 2: bf16 operands on the MXU, f32 accumulation, f32 bias add.
    y = jnp.dot(h.astype(jnp.bfloat16), w2_ref[...],
                preferred_element_type=jnp.float32) + b2_ref[...]
    # Tanh output activation (EUP slot).
    o_ref[...] = jnp.tanh(y).astype(o_ref.dtype)


def generator_forward(x, w1, b1, w2, b2, *, tile_b=256):
    """x: [B, z_dim] f32, w1: [z_dim, hidden], b1: [hidden] or [1, hidden],
    w2: [hidden, img_dim], b2: [img_dim] or [1, img_dim].  Returns [B, img_dim]."""
    B, z_dim = x.shape
    hidden = w1.shape[1]
    img_dim = w2.shape[1]

    k_pad = _round_up(z_dim, LANE)            # 64  -> 128 (aligned K)
    img_pad = _round_up(img_dim, LANE)        # 784 -> 896 (lane-dense output)
    tb = min(tile_b, _round_up(B, SUBLANE))   # batch tile (>=8, sublane aligned)
    b_pad = _round_up(B, tb)

    # Pad inputs / params outside the kernel; padded regions are zero so the
    # math is unchanged, and sliced off again below.
    x_p = jnp.pad(x, ((0, b_pad - B), (0, k_pad - z_dim)))
    w1_p = jnp.pad(w1, ((0, k_pad - z_dim), (0, 0))).astype(jnp.bfloat16)
    b1_p = b1.reshape(1, hidden).astype(jnp.float32)
    w2_p = jnp.pad(w2, ((0, 0), (0, img_pad - img_dim))).astype(jnp.bfloat16)
    b2_p = jnp.pad(b2.reshape(1, img_dim),
                   ((0, 0), (0, img_pad - img_dim))).astype(jnp.float32)

    out = pl.pallas_call(
        generator_kernel,
        out_shape=jax.ShapeDtypeStruct((b_pad, img_pad), x.dtype),
        grid=(b_pad // tb,),
        in_specs=[
            pl.BlockSpec((tb, k_pad), lambda i: (i, 0)),        # x tile
            pl.BlockSpec((k_pad, hidden), lambda i: (0, 0)),    # w1 (resident)
            pl.BlockSpec((1, hidden), lambda i: (0, 0)),        # b1 (resident)
            pl.BlockSpec((hidden, img_pad), lambda i: (0, 0)),  # w2 (resident)
            pl.BlockSpec((1, img_pad), lambda i: (0, 0)),       # b2 (resident)
        ],
        out_specs=pl.BlockSpec((tb, img_pad), lambda i: (i, 0)),
        compiler_params=pltpu.CompilerParams(
            dimension_semantics=("parallel",)),
    )(x_p, w1_p, b1_p, w2_p, b2_p)

    return out[:B, :img_dim]


def init_params(key, z_dim=Z_DIM, hidden=HIDDEN, img_dim=IMG_DIM):
    """Deterministic init mimicking PyTorch nn.Linear (uniform +/- 1/sqrt(fan_in)).
    Weights stored [in_features, out_features] (transposed vs. PyTorch)."""
    k1, k2, k3, k4 = jax.random.split(key, 4)
    lim1 = 1.0 / jnp.sqrt(z_dim)
    lim2 = 1.0 / jnp.sqrt(hidden)
    w1 = jax.random.uniform(k1, (z_dim, hidden), jnp.float32, -lim1, lim1)
    b1 = jax.random.uniform(k2, (1, hidden), jnp.float32, -lim1, lim1)
    w2 = jax.random.uniform(k3, (hidden, img_dim), jnp.float32, -lim2, lim2)
    b2 = jax.random.uniform(k4, (1, img_dim), jnp.float32, -lim2, lim2)
    return w1, b1, w2, b2


def _reference(x, w1, b1, w2, b2):
    """Pure-JAX reference with matching bf16 MXU operand rounding."""
    h = jnp.dot(x.astype(jnp.bfloat16), w1.astype(jnp.bfloat16),
                preferred_element_type=jnp.float32) + b1
    h = jnp.where(h > 0, h, 0.1 * h)
    y = jnp.dot(h.astype(jnp.bfloat16), w2.astype(jnp.bfloat16),
                preferred_element_type=jnp.float32) + b2
    return jnp.tanh(y)


if __name__ == "__main__":
    key = jax.random.PRNGKey(0)
    k_param, k_x1, k_x2 = jax.random.split(key, 3)

    w1, b1, w2, b2 = init_params(k_param)

    # Small-batch check (single grid point, tb = 16).
    x_small = jax.random.normal(k_x1, (16, Z_DIM), jnp.float32)
    out_small = jax.block_until_ready(generator_forward(x_small, w1, b1, w2, b2))
    ref_small = _reference(x_small, w1, b1, w2, b2)
    assert out_small.shape == (16, IMG_DIM)
    assert jnp.allclose(out_small, ref_small, atol=2e-2, rtol=0), (
        float(jnp.max(jnp.abs(out_small - ref_small))))

    # Multi-tile check (exercises the parallel batch grid axis, 2 tiles of 256).
    x_big = jax.random.normal(k_x2, (512, Z_DIM), jnp.float32)
    out_big = jax.block_until_ready(generator_forward(x_big, w1, b1, w2, b2))
    ref_big = _reference(x_big, w1, b1, w2, b2)
    assert out_big.shape == (512, IMG_DIM)
    assert jnp.allclose(out_big, ref_big, atol=2e-2, rtol=0), (
        float(jnp.max(jnp.abs(out_big - ref_big))))

    print("KERNEL_OK")
</pallas_src>

<mosaic_0001>
module attributes {stable_mosaic.version = 11 : i64} {
  func.func @generator_kernel(%arg0: i32, %arg1: memref<16x128xf32, #tpu.memory_space<vmem>>, %arg2: memref<128x256xbf16, #tpu.memory_space<vmem>>, %arg3: memref<1x256xf32, #tpu.memory_space<vmem>>, %arg4: memref<256x896xbf16, #tpu.memory_space<vmem>>, %arg5: memref<1x896xf32, #tpu.memory_space<vmem>>, %arg6: memref<16x896xf32, #tpu.memory_space<vmem>>) attributes {dimension_semantics = [#tpu.dimension_semantics<parallel>], iteration_bounds = array<i64: 1>, scalar_prefetch = 0 : i64, scratch_operands = 0 : i64, tpu.core_type = #tpu.core_type<tc>, window_params = [{transform_indices = @transform_0, window_bounds = array<i64: 16, 128>}, {pipeline_mode = #tpu.pipeline_mode<synchronous>, transform_indices = @transform_1, window_bounds = array<i64: 128, 256>}, {pipeline_mode = #tpu.pipeline_mode<synchronous>, transform_indices = @transform_2, window_bounds = array<i64: 1, 256>}, {pipeline_mode = #tpu.pipeline_mode<synchronous>, transform_indices = @transform_3, window_bounds = array<i64: 256, 896>}, {pipeline_mode = #tpu.pipeline_mode<synchronous>, transform_indices = @transform_4, window_bounds = array<i64: 1, 896>}, {transform_indices = @transform_5, window_bounds = array<i64: 16, 896>}]} {
    %c0 = arith.constant 0 : index
    %c0_0 = arith.constant 0 : index
    %0 = vector.load %arg1[%c0, %c0_0] : memref<16x128xf32, #tpu.memory_space<vmem>>, vector<16x128xf32>
    %1 = arith.truncf %0 : vector<16x128xf32> to vector<16x128xbf16>
    %c0_1 = arith.constant 0 : index
    %c0_2 = arith.constant 0 : index
    %2 = vector.load %arg2[%c0_1, %c0_2] : memref<128x256xbf16, #tpu.memory_space<vmem>>, vector<128x256xbf16>
    %cst = arith.constant dense<0.000000e+00> : vector<16x256xf32>
    %3 = tpu.matmul %1, %2, %cst {dimension_numbers = #tpu.dot_dimension_numbers<[1], [0], [0], [1], [0, 0, 1, 1], [], []>} : vector<16x128xbf16>, vector<128x256xbf16>, vector<16x256xf32> -> vector<16x256xf32>
    %c0_3 = arith.constant 0 : index
    %c0_4 = arith.constant 0 : index
    %4 = vector.load %arg3[%c0_3, %c0_4] : memref<1x256xf32, #tpu.memory_space<vmem>>, vector<1x256xf32>
    %5 = vector.broadcast %4 : vector<1x256xf32> to vector<16x256xf32>
    %6 = arith.addf %3, %5 : vector<16x256xf32>
    %cst_5 = arith.constant 0.000000e+00 : f32
    %7 = vector.broadcast %cst_5 : f32 to vector<16x256xf32>
    %8 = arith.cmpf ogt, %6, %7 : vector<16x256xf32>
    %cst_6 = arith.constant 1.000000e-01 : f32
    %9 = vector.broadcast %cst_6 : f32 to vector<16x256xf32>
    %10 = arith.mulf %9, %6 : vector<16x256xf32>
    %11 = arith.select %8, %6, %10 : vector<16x256xi1>, vector<16x256xf32>
    %12 = arith.truncf %11 : vector<16x256xf32> to vector<16x256xbf16>
    %c0_7 = arith.constant 0 : index
    %c0_8 = arith.constant 0 : index
    %13 = vector.load %arg4[%c0_7, %c0_8] : memref<256x896xbf16, #tpu.memory_space<vmem>>, vector<256x896xbf16>
    %cst_9 = arith.constant dense<0.000000e+00> : vector<16x896xf32>
    %14 = tpu.matmul %12, %13, %cst_9 {dimension_numbers = #tpu.dot_dimension_numbers<[1], [0], [0], [1], [0, 0, 1, 1], [], []>} : vector<16x256xbf16>, vector<256x896xbf16>, vector<16x896xf32> -> vector<16x896xf32>
    %c0_10 = arith.constant 0 : index
    %c0_11 = arith.constant 0 : index
    %15 = vector.load %arg5[%c0_10, %c0_11] : memref<1x896xf32, #tpu.memory_space<vmem>>, vector<1x896xf32>
    %16 = vector.broadcast %15 : vector<1x896xf32> to vector<16x896xf32>
    %17 = arith.addf %14, %16 : vector<16x896xf32>
    %18 = math.tanh %17 : vector<16x896xf32>
    %c0_12 = arith.constant 0 : index
    %c0_13 = arith.constant 0 : index
    %19 = vector.load %arg6[%c0_12, %c0_13] : memref<16x896xf32, #tpu.memory_space<vmem>>, vector<16x896xf32>
    tpu.vector_store %arg6[%c0_12, %c0_13], %18 {strides = array<i32>} : memref<16x896xf32, #tpu.memory_space<vmem>>, vector<16x896xf32>,
    return
  }
  func.func @transform_0(%arg0: i32) -> (i32, i32) {
    %c0_i32 = arith.constant 0 : i32
    %c0_i32_0 = arith.constant 0 : i32
    return %arg0, %c0_i32 : i32, i32
  }
  func.func @transform_1(%arg0: i32) -> (i32, i32) {
    %c0_i32 = arith.constant 0 : i32
    %c0_i32_0 = arith.constant 0 : i32
    %c0_i32_1 = arith.constant 0 : i32
    return %c0_i32, %c0_i32_0 : i32, i32
  }
  func.func @transform_2(%arg0: i32) -> (i32, i32) {
    %c0_i32 = arith.constant 0 : i32
    %c0_i32_0 = arith.constant 0 : i32
    %c0_i32_1 = arith.constant 0 : i32
    return %c0_i32, %c0_i32_0 : i32, i32
  }
  func.func @transform_3(%arg0: i32) -> (i32, i32) {
    %c0_i32 = arith.constant 0 : i32
    %c0_i32_0 = arith.constant 0 : i32
    %c0_i32_1 = arith.constant 0 : i32
    return %c0_i32, %c0_i32_0 : i32, i32
  }
  func.func @transform_4(%arg0: i32) -> (i32, i32) {
    %c0_i32 = arith.constant 0 : i32
    %c0_i32_0 = arith.constant 0 : i32
    %c0_i32_1 = arith.constant 0 : i32
    return %c0_i32, %c0_i32_0 : i32, i32
  }
  func.func @transform_5(%arg0: i32) -> (i32, i32) {
    %c0_i32 = arith.constant 0 : i32
    %c0_i32_0 = arith.constant 0 : i32
    return %arg0, %c0_i32 : i32, i32
  }
}

</mosaic_0001>

<llo_original>
// kernel: tpu_custom_call.1
$region0: #{tpu_custom_call.1}
  #allocation0 [shape = 'u32[]', space=smem, size = 0x4, offset = 0x4, fixed_abs, tag = 'smem constant byte address 0x4 - core index']
  #allocation1 [shape = 'u32[144,128]{1,0:T(1,128)}', space=vmem, size = 0x12000, scoped, tag = 'internal scratch']
  %s0 = inlined_call_operand.hbm [shape: f32[16,128], index: 0, kind: input, shape index: {}]
  %s1 = inlined_call_operand.hbm [shape: bf16[128,256], index: 1, kind: input, shape index: {}]
  %s2 = inlined_call_operand.vmem [shape: f32[1,256], index: 2, kind: input, shape index: {}]
  %s3 = inlined_call_operand.hbm [shape: bf16[256,896], index: 3, kind: input, shape index: {}]
  %s4 = inlined_call_operand.vmem [shape: f32[1,896], index: 4, kind: input, shape index: {}]
  %s5 = inlined_call_operand.hbm [shape: f32[16,896], index: 5, kind: output, shape index: {}]
  %s6 = sld [smem:[#allocation0]]
  $region42: #{tpu_custom_call.1} parent=0
    _
  %s8 = ssub.s32 1, %s6
  %s9 = scalar_select 0, %s8, %s6
  $region1: #{tpu_custom_call.1} parent=0
    #allocation2 [shape = 'u8[8192]{0}', space=vmem, size = 0x2000, scoped, tag = 'input window, operand 0, single buffered']
    #allocation3 [shape = 's32[1]{0}', space=sflag, size = 0x4, scoped, tag = 'scoped memory for tpu_custom_call.1']
    #allocation4 [shape = 's32[1]{0}', space=sflag, size = 0x4, scoped, tag = 'scoped memory for tpu_custom_call.1']
    #allocation5 [shape = 'u8[65536]{0}', space=vmem, size = 0x10000, scoped, tag = 'input window, operand 1, single buffered']
    #allocation6 [shape = 's32[1]{0}', space=sflag, size = 0x4, scoped, tag = 'scoped memory for tpu_custom_call.1']
    #allocation7 [shape = 'u8[458752]{0}', space=vmem, size = 0x70000, scoped, tag = 'input window, operand 3, single buffered']
    #allocation8 [shape = 'u8[57344]{0}', space=vmem, size = 0xe000, scoped, tag = 'output window, operand 0, single buffered']
    %10 = vsyncpa [#allocation3], 0
    %11 = vsyncpa [#allocation6], 0
    %12 = vsyncpa [#allocation4], 0
    // Predicated region
    $region2: #{tpu_custom_call.1} parent=1 // pred_check
      _
    $region3: #{tpu_custom_call.1} parent=1 // pred_check_branch
      %14 = sbr.rel (0) target = $region5
    $region4: #{tpu_custom_call.1} parent=1 // pred_region
      %s16 = ssub.s32 256, 256
      %17 = vsyncadd [#allocation3], %s16
      %s18 = sshll.u32 [#allocation2], 4
      %s19 = int_to_ptr.vmem [resolvable:$true] %s18
      %24 = dma.hbm_to_vmem [thread:$0]  %s0, 256, %s19, [#allocation3], 128, 128, 8
    $region5: #{tpu_custom_call.1} parent=1 // pred_fallthru
      _
    // Predicated region
    $region6: #{tpu_custom_call.1} parent=1 // pred_check
      _
    $region7: #{tpu_custom_call.1} parent=1 // pred_check_branch
      %26 = sbr.rel (0) target = $region9
    $region8: #{tpu_custom_call.1} parent=1 // pred_region
      %s28 = ssub.s32 2048, 2048
      %29 = vsyncadd [#allocation6], %s28
      %s30 = sshll.u32 [#allocation5], 4
      %s31 = int_to_ptr.vmem [resolvable:$true] %s30
      %36 = dma.hbm_to_vmem [thread:$0]  %s1, 2048, %s31, [#allocation6], 128, 128, 8
    $region9: #{tpu_custom_call.1} parent=1 // pred_fallthru
      _
    // Predicated region
    $region10: #{tpu_custom_call.1} parent=1 // pred_check
      _
    $region11: #{tpu_custom_call.1} parent=1 // pred_check_branch
      %38 = sbr.rel (0) target = $region13
    $region12: #{tpu_custom_call.1} parent=1 // pred_region
      _
    $region13: #{tpu_custom_call.1} parent=1 // pred_fallthru
      _
    // Predicated region
    $region14: #{tpu_custom_call.1} parent=1 // pred_check
      _
    $region15: #{tpu_custom_call.1} parent=1 // pred_check_branch
      %40 = sbr.rel (0) target = $region17
    $region16: #{tpu_custom_call.1} parent=1 // pred_region
      %s42 = ssub.s32 14336, 14336
      %43 = vsyncadd [#allocation6], %s42
      %s44 = sshll.u32 [#allocation7], 4
      %s45 = int_to_ptr.vmem [resolvable:$true] %s44
      %50 = dma.hbm_to_vmem [thread:$0]  %s3, 14336, %s45, [#allocation6], 448, 448, 28
    $region17: #{tpu_custom_call.1} parent=1 // pred_fallthru
      _
    // Predicated region
    $region18: #{tpu_custom_call.1} parent=1 // pred_check
      _
    $region19: #{tpu_custom_call.1} parent=1 // pred_check_branch
      %52 = sbr.rel (0) target = $region21
    $region20: #{tpu_custom_call.1} parent=1 // pred_region
      _
    $region21: #{tpu_custom_call.1} parent=1 // pred_fallthru
      _
    // Predicated region
    $region22: #{tpu_custom_call.1} parent=1 // pred_check
      _
    $region23: #{tpu_custom_call.1} parent=1 // pred_check_branch
      %54 = sbr.rel (0) target = $region25
    $region24: #{tpu_custom_call.1} parent=1 // pred_region
      %55 = dma.done [#allocation3], 256
    $region25: #{tpu_custom_call.1} parent=1 // pred_fallthru
      _
    // Predicated region
    $region26: #{tpu_custom_call.1} parent=1 // pred_check
      _
    $region27: #{tpu_custom_call.1} parent=1 // pred_check_branch
      %57 = sbr.rel (0) target = $region29
    $region28: #{tpu_custom_call.1} parent=1 // pred_region
      %58 = dma.done [#allocation6], 2048
    $region29: #{tpu_custom_call.1} parent=1 // pred_fallthru
      _
    // Predicated region
    $region30: #{tpu_custom_call.1} parent=1 // pred_check
      _
    $region31: #{tpu_custom_call.1} parent=1 // pred_check_branch
      %60 = sbr.rel (0) target = $region33
    $region32: #{tpu_custom_call.1} parent=1 // pred_region
      %61 = dma.done [#allocation6], 14336
    $region33: #{tpu_custom_call.1} parent=1 // pred_fallthru
      _
    %v63 = vld [vmem:[#allocation2] sm:$0xff]
    %v64 = vld [vmem:[#allocation2 + $0x8] sm:$0xff]
    %v65 = vpack.c.bf16 %v64, %v63
    %v66 = vld [vmem:[#allocation5] sm:$0xff]
    %v67 = vld [vmem:[#allocation5 + $0x8] sm:$0xff]
    %v68 = vld [vmem:[#allocation5 + $0x10] sm:$0xff]
    %v69 = vld [vmem:[#allocation5 + $0x18] sm:$0xff]
    %v70 = vld [vmem:[#allocation5 + $0x20] sm:$0xff]
    %v71 = vld [vmem:[#allocation5 + $0x28] sm:$0xff]
    %v72 = vld [vmem:[#allocation5 + $0x30] sm:$0xff]
    %v73 = vld [vmem:[#allocation5 + $0x38] sm:$0xff]
    %v74 = vld [vmem:[#allocation5 + $0x40] sm:$0xff]
    %v75 = vld [vmem:[#allocation5 + $0x48] sm:$0xff]
    %v76 = vld [vmem:[#allocation5 + $0x50] sm:$0xff]
    %v77 = vld [vmem:[#allocation5 + $0x58] sm:$0xff]
    %v78 = vld [vmem:[#allocation5 + $0x60] sm:$0xff]
    %v79 = vld [vmem:[#allocation5 + $0x68] sm:$0xff]
    %v80 = vld [vmem:[#allocation5 + $0x70] sm:$0xff]
    %v81 = vld [vmem:[#allocation5 + $0x78] sm:$0xff]
    %v82 = vld [vmem:[%s2] sm:$0x3]
    %v84 = vlaneseq
    %v85 = vshrl.u32 %v84, 7
    %v86 = vsub.s32 0, %v85
    %v87 = vrot.slane %v82, %v86
    %v88 = vlaneseq
    %v89 = vshrl.u32 %v88, 7
    %v90 = vsub.s32 1, %v89
    %v91 = vrot.slane %v82, %v90
    %v110 = vunpack.c.l.b16 %v66
    %v111 = vunpack.c.h.b16 %v66
    %v112 = vunpack.c.l.b16 %v67
    %v113 = vunpack.c.h.b16 %v67
    %v114 = vunpack.c.l.b16 %v68
    %v115 = vunpack.c.h.b16 %v68
    %v116 = vunpack.c.l.b16 %v69
    %v117 = vunpack.c.h.b16 %v69
    %v118 = vunpack.c.l.b16 %v70
    %v119 = vunpack.c.h.b16 %v70
    %v120 = vunpack.c.l.b16 %v71
    %v121 = vunpack.c.h.b16 %v71
    %v122 = vunpack.c.l.b16 %v72
    %v123 = vunpack.c.h.b16 %v72
    %v124 = vunpack.c.l.b16 %v73
    %v125 = vunpack.c.h.b16 %v73
    %v126 = vunpack.c.l.b16 %v74
    %v127 = vunpack.c.h.b16 %v74
    %v128 = vunpack.c.l.b16 %v75
    %v129 = vunpack.c.h.b16 %v75
    %v130 = vunpack.c.l.b16 %v76
    %v131 = vunpack.c.h.b16 %v76
    %v132 = vunpack.c.l.b16 %v77
    %v133 = vunpack.c.h.b16 %v77
    %v134 = vunpack.c.l.b16 %v78
    %v135 = vunpack.c.h.b16 %v78
    %v136 = vunpack.c.l.b16 %v79
    %v137 = vunpack.c.h.b16 %v79
    %v138 = vunpack.c.l.b16 %v80
    %v139 = vunpack.c.h.b16 %v80
    %v140 = vunpack.c.l.b16 %v81
    %v141 = vunpack.c.h.b16 %v81
    %v142 = vpack.c.b16 %v112, %v110
    %v143 = vpack.c.b16 %v113, %v111
    %v144 = vpack.c.b16 %v116, %v114
    %v145 = vpack.c.b16 %v117, %v115
    %v146 = vpack.c.b16 %v120, %v118
    %v147 = vpack.c.b16 %v121, %v119
    %v148 = vpack.c.b16 %v124, %v122
    %v149 = vpack.c.b16 %v125, %v123
    %v150 = vpack.c.b16 %v128, %v126
    %v151 = vpack.c.b16 %v129, %v127
    %v152 = vpack.c.b16 %v132, %v130
    %v153 = vpack.c.b16 %v133, %v131
    %v154 = vpack.c.b16 %v136, %v134
    %v155 = vpack.c.b16 %v137, %v135
    %v156 = vpack.c.b16 %v140, %v138
    %v157 = vpack.c.b16 %v141, %v139
    %174 = vmatprep.subr.bf16.mxu0 %v143
    %175 = vmatpush1.bf16.msra.mxu0 %v142
    %176 = vmatprep.subr.bf16.mxu0 %v145
    %177 = vmatpush1.bf16.msra.mxu0 %v144
    %178 = vmatprep.subr.bf16.mxu0 %v147
    %179 = vmatpush1.bf16.msra.mxu0 %v146
    %180 = vmatprep.subr.bf16.mxu0 %v149
    %181 = vmatpush1.bf16.msra.mxu0 %v148
    %182 = vmatprep.subr.bf16.mxu0 %v151
    %183 = vmatpush1.bf16.msra.mxu0 %v150
    %184 = vmatprep.subr.bf16.mxu0 %v153
    %185 = vmatpush1.bf16.msra.mxu0 %v152
    %186 = vmatprep.subr.bf16.mxu0 %v155
    %187 = vmatpush1.bf16.msra.mxu0 %v154
    %188 = vmatprep.subr.bf16.mxu0 %v157
    %189 = vmatpush1.bf16.msra.mxu0 %v156
    %190 = vmatprep.subr.bf16.mxu0 0
    %191 = vmatpush1.bf16.msra.mxu0 0
    %192 = vmatprep.subr.bf16.mxu0 0
    %193 = vmatpush1.bf16.msra.mxu0 0
    %194 = vmatprep.subr.bf16.mxu0 0
    %195 = vmatpush1.bf16.msra.mxu0 0
    %196 = vmatprep.subr.bf16.mxu0 0
    %197 = vmatpush1.bf16.msra.mxu0 0
    %198 = vmatprep.subr.bf16.mxu0 0
    %199 = vmatpush1.bf16.msra.mxu0 0
    %200 = vmatprep.subr.bf16.mxu0 0
    %201 = vmatpush1.bf16.msra.mxu0 0
    %202 = vmatprep.subr.bf16.mxu0 0
    %203 = vmatpush1.bf16.msra.mxu0 0
    %204 = vmatprep.subr.bf16.mxu0 0
    %205 = vmatpush1.bf16.msra.mxu0 0
    %206 = vmatprep.mubr.bf16.mxu0 0
    %207 = vmatmul.mubr.bf16.gmra.mrb[0].mxu0 %v65
    %v208 = vpop.f32.mrb[0].mxu0
    %v209 = vadd.f32 %v87, %v208
    %v210 = vpop.f32.mrb[0].mxu0
    %v211 = vadd.f32 %v91, %v210
    %v212 = vpop.f32.mrb[0].mxu0
    %v213 = vadd.f32 %v87, %v212
    %v214 = vpop.f32.mrb[0].mxu0
    %v215 = vadd.f32 %v91, %v214
    %216 = vdwg.mxu0
    %vm217 = vcmp.gt.f32.partialorder %v209, 0.0
    %vm218 = vcmp.gt.f32.partialorder %v211, 0.0
    %vm219 = vcmp.gt.f32.partialorder %v213, 0.0
    %vm220 = vcmp.gt.f32.partialorder %v215, 0.0
    %v221 = vmul.f32 %v209, 0.1
    %v222 = vmul.f32 %v211, 0.1
    %v223 = vmul.f32 %v213, 0.1
    %v224 = vmul.f32 %v215, 0.1
    %v225 = vsel %vm217, %v209, %v221
    %v226 = vsel %vm218, %v211, %v222
    %v227 = vsel %vm219, %v213, %v223
    %v228 = vsel %vm220, %v215, %v224
    %v229 = vpack.c.bf16 %v227, %v225
    %v230 = vpack.c.bf16 %v228, %v226
    %v231 = vld [vmem:[#allocation7] sm:$0xff]
    %v232 = vld [vmem:[#allocation7 + $0x8] sm:$0xff]
    %v233 = vld [vmem:[#allocation7 + $0x10] sm:$0xff]
    %v234 = vld [vmem:[#allocation7 + $0x18] sm:$0xf]
    %v235 = vld [vmem:[#allocation7 + $0x1c] sm:$0xff]
    %v236 = vld [vmem:[#allocation7 + $0x24] sm:$0xff]
    %v237 = vld [vmem:[#allocation7 + $0x2c] sm:$0xff]
    %v238 = vld [vmem:[#allocation7 + $0x34] sm:$0xf]
    %v239 = vld [vmem:[#allocation7 + $0x38] sm:$0xff]
    %v240 = vld [vmem:[#allocation7 + $0x40] sm:$0xff]
    %v241 = vld [vmem:[#allocation7 + $0x48] sm:$0xff]
    %v242 = vld [vmem:[#allocation7 + $0x50] sm:$0xf]
    %v243 = vld [vmem:[#allocation7 + $0x54] sm:$0xff]
    %v244 = vld [vmem:[#allocation7 + $0x5c] sm:$0xff]
    %v245 = vld [vmem:[#allocation7 + $0x64] sm:$0xff]
    %v246 = vld [vmem:[#allocation7 + $0x6c] sm:$0xf]
    %v247 = vld [vmem:[#allocation7 + $0x70] sm:$0xff]
    %v248 = vld [vmem:[#allocation7 + $0x78] sm:$0xff]
    %v249 = vld [vmem:[#allocation7 + $0x80] sm:$0xff]
    %v250 = vld [vmem:[#allocation7 + $0x88] sm:$0xf]
    %v251 = vld [vmem:[#allocation7 + $0x8c] sm:$0xff]
    %v252 = vld [vmem:[#allocation7 + $0x94] sm:$0xff]
    %v253 = vld [vmem:[#allocation7 + $0x9c] sm:$0xff]
    %v254 = vld [vmem:[#allocation7 + $0xa4] sm:$0xf]
    %v255 = vld [vmem:[#allocation7 + $0xa8] sm:$0xff]
    %v256 = vld [vmem:[#allocation7 + $0xb0] sm:$0xff]
    %v257 = vld [vmem:[#allocation7 + $0xb8] sm:$0xff]
    %v258 = vld [vmem:[#allocation7 + $0xc0] sm:$0xf]
    %v259 = vld [vmem:[#allocation7 + $0xc4] sm:$0xff]
    %v260 = vld [vmem:[#allocation7 + $0xcc] sm:$0xff]
    %v261 = vld [vmem:[#allocation7 + $0xd4] sm:$0xff]
    %v262 = vld [vmem:[#allocation7 + $0xdc] sm:$0xf]
    %v263 = vld [vmem:[#allocation7 + $0xe0] sm:$0xff]
    %v264 = vld [vmem:[#allocation7 + $0xe8] sm:$0xff]
    %v265 = vld [vmem:[#allocation7 + $0xf0] sm:$0xff]
    %v266 = vld [vmem:[#allocation7 + $0xf8] sm:$0xf]
    %v267 = vld [vmem:[#allocation7 + $0xfc] sm:$0xff]
    %v268 = vld [vmem:[#allocation7 + $0x104] sm:$0xff]
    %v269 = vld [vmem:[#allocation7 + $0x10c] sm:$0xff]
    %v270 = vld [vmem:[#allocation7 + $0x114] sm:$0xf]
    %v271 = vld [vmem:[#allocation7 + $0x118] sm:$0xff]
    %v272 = vld [vmem:[#allocation7 + $0x120] sm:$0xff]
    %v273 = vld [vmem:[#allocation7 + $0x128] sm:$0xff]
    %v274 = vld [vmem:[#allocation7 + $0x130] sm:$0xf]
    %v275 = vld [vmem:[#allocation7 + $0x134] sm:$0xff]
    %v276 = vld [vmem:[#allocation7 + $0x13c] sm:$0xff]
    %v277 = vld [vmem:[#allocation7 + $0x144] sm:$0xff]
    %v278 = vld [vmem:[#allocation7 + $0x14c] sm:$0xf]
    %v279 = vld [vmem:[#allocation7 + $0x150] sm:$0xff]
    %v280 = vld [vmem:[#allocation7 + $0x158] sm:$0xff]
    %v281 = vld [vmem:[#allocation7 + $0x160] sm:$0xff]
    %v282 = vld [vmem:[#allocation7 + $0x168] sm:$0xf]
    %v283 = vld [vmem:[#allocation7 + $0x16c] sm:$0xff]
    %v284 = vld [vmem:[#allocation7 + $0x174] sm:$0xff]
    %v285 = vld [vmem:[#allocation7 + $0x17c] sm:$0xff]
    %v286 = vld [vmem:[#allocation7 + $0x184] sm:$0xf]
    %v287 = vld [vmem:[#allocation7 + $0x188] sm:$0xff]
    %v288 = vld [vmem:[#allocation7 + $0x190] sm:$0xff]
    %v289 = vld [vmem:[#allocation7 + $0x198] sm:$0xff]
    %v290 = vld [vmem:[#allocation7 + $0x1a0] sm:$0xf]
    %v291 = vld [vmem:[#allocation7 + $0x1a4] sm:$0xff]
    %v292 = vld [vmem:[#allocation7 + $0x1ac] sm:$0xff]
    %v293 = vld [vmem:[#allocation7 + $0x1b4] sm:$0xff]
    %v294 = vld [vmem:[#allocation7 + $0x1bc] sm:$0xf]
    %v295 = vld [vmem:[#allocation7 + $0x1c0] sm:$0xff]
    %v296 = vld [vmem:[#allocation7 + $0x1c8] sm:$0xff]
    %v297 = vld [vmem:[#allocation7 + $0x1d0] sm:$0xff]
    %v298 = vld [vmem:[#allocation7 + $0x1d8] sm:$0xf]
    %v299 = vld [vmem:[#allocation7 + $0x1dc] sm:$0xff]
    %v300 = vld [vmem:[#allocation7 + $0x1e4] sm:$0xff]
    %v301 = vld [vmem:[#allocation7 + $0x1ec] sm:$0xff]
    %v302 = vld [vmem:[#allocation7 + $0x1f4] sm:$0xf]
    %v303 = vld [vmem:[#allocation7 + $0x1f8] sm:$0xff]
    %v304 = vld [vmem:[#allocation7 + $0x200] sm:$0xff]
    %v305 = vld [vmem:[#allocation7 + $0x208] sm:$0xff]
    %v306 = vld [vmem:[#allocation7 + $0x210] sm:$0xf]
    %v307 = vld [vmem:[#allocation7 + $0x214] sm:$0xff]
    %v308 = vld [vmem:[#allocation7 + $0x21c] sm:$0xff]
    %v309 = vld [vmem:[#allocation7 + $0x224] sm:$0xff]
    %v310 = vld [vmem:[#allocation7 + $0x22c] sm:$0xf]
    %v311 = vld [vmem:[#allocation7 + $0x230] sm:$0xff]
    %v312 = vld [vmem:[#allocation7 + $0x238] sm:$0xff]
    %v313 = vld [vmem:[#allocation7 + $0x240] sm:$0xff]
    %v314 = vld [vmem:[#allocation7 + $0x248] sm:$0xf]
    %v315 = vld [vmem:[#allocation7 + $0x24c] sm:$0xff]
    %v316 = vld [vmem:[#allocation7 + $0x254] sm:$0xff]
    %v317 = vld [vmem:[#allocation7 + $0x25c] sm:$0xff]
    %v318 = vld [vmem:[#allocation7 + $0x264] sm:$0xf]
    %v319 = vld [vmem:[#allocation7 + $0x268] sm:$0xff]
    %v320 = vld [vmem:[#allocation7 + $0x270] sm:$0xff]
    %v321 = vld [vmem:[#allocation7 + $0x278] sm:$0xff]
    %v322 = vld [vmem:[#allocation7 + $0x280] sm:$0xf]
    %v323 = vld [vmem:[#allocation7 + $0x284] sm:$0xff]
    %v324 = vld [vmem:[#allocation7 + $0x28c] sm:$0xff]
    %v325 = vld [vmem:[#allocation7 + $0x294] sm:$0xff]
    %v326 = vld [vmem:[#allocation7 + $0x29c] sm:$0xf]
    %v327 = vld [vmem:[#allocation7 + $0x2a0] sm:$0xff]
    %v328 = vld [vmem:[#allocation7 + $0x2a8] sm:$0xff]
    %v329 = vld [vmem:[#allocation7 + $0x2b0] sm:$0xff]
    %v330 = vld [vmem:[#allocation7 + $0x2b8] sm:$0xf]
    %v331 = vld [vmem:[#allocation7 + $0x2bc] sm:$0xff]
    %v332 = vld [vmem:[#allocation7 + $0x2c4] sm:$0xff]
    %v333 = vld [vmem:[#allocation7 + $0x2cc] sm:$0xff]
    %v334 = vld [vmem:[#allocation7 + $0x2d4] sm:$0xf]
    %v335 = vld [vmem:[#allocation7 + $0x2d8] sm:$0xff]
    %v336 = vld [vmem:[#allocation7 + $0x2e0] sm:$0xff]
    %v337 = vld [vmem:[#allocation7 + $0x2e8] sm:$0xff]
    %v338 = vld [vmem:[#allocation7 + $0x2f0] sm:$0xf]
    %v339 = vld [vmem:[#allocation7 + $0x2f4] sm:$0xff]
    %v340 = vld [vmem:[#allocation7 + $0x2fc] sm:$0xff]
    %v341 = vld [vmem:[#allocation7 + $0x304] sm:$0xff]
    %v342 = vld [vmem:[#allocation7 + $0x30c] sm:$0xf]
    %v343 = vld [vmem:[#allocation7 + $0x310] sm:$0xff]
    %v344 = vld [vmem:[#allocation7 + $0x318] sm:$0xff]
    %v345 = vld [vmem:[#allocation7 + $0x320] sm:$0xff]
    %v346 = vld [vmem:[#allocation7 + $0x328] sm:$0xf]
    %v347 = vld [vmem:[#allocation7 + $0x32c] sm:$0xff]
    %v348 = vld [vmem:[#allocation7 + $0x334] sm:$0xff]
    %v349 = vld [vmem:[#allocation7 + $0x33c] sm:$0xff]
    %v350 = vld [vmem:[#allocation7 + $0x344] sm:$0xf]
    %v351 = vld [vmem:[#allocation7 + $0x348] sm:$0xff]
    %v352 = vld [vmem:[#allocation7 + $0x350] sm:$0xff]
    %v353 = vld [vmem:[#allocation7 + $0x358] sm:$0xff]
    %v354 = vld [vmem:[#allocation7 + $0x360] sm:$0xf]
    %v355 = vld [vmem:[#allocation7 + $0x364] sm:$0xff]
    %v356 = vld [vmem:[#allocation7 + $0x36c] sm:$0xff]
    %v357 = vld [vmem:[#allocation7 + $0x374] sm:$0xff]
    %v358 = vld [vmem:[#allocation7 + $0x37c] sm:$0xf]
    %v359 = vld [vmem:[%s4] sm:$0xff]
    %v361 = vlaneseq
    %v362 = vshrl.u32 %v361, 7
    %v363 = vsub.s32 0, %v362
    %v364 = vrot.slane %v359, %v363
    %v365 = vlaneseq
    %v366 = vshrl.u32 %v365, 7
    %v367 = vsub.s32 1, %v366
    %v368 = vrot.slane %v359, %v367
    %v369 = vlaneseq
    %v370 = vshrl.u32 %v369, 7
    %v371 = vsub.s32 2, %v370
    %v372 = vrot.slane %v359, %v371
    %v373 = vlaneseq
    %v374 = vshrl.u32 %v373, 7
    %v375 = vsub.s32 3, %v374
    %v376 = vrot.slane %v359, %v375
    %v377 = vlaneseq
    %v378 = vshrl.u32 %v377, 7
    %v379 = vsub.s32 4, %v378
    %v380 = vrot.slane %v359, %v379
    %v381 = vlaneseq
    %v382 = vshrl.u32 %v381, 7
    %v383 = vsub.s32 5, %v382
    %v384 = vrot.slane %v359, %v383
    %v385 = vlaneseq
    %v386 = vshrl.u32 %v385, 7
    %v387 = vsub.s32 6, %v386
    %v388 = vrot.slane %v359, %v387
    %v524 = vunpack.c.l.b16 %v231
    %v525 = vunpack.c.h.b16 %v231
    %v526 = vunpack.c.l.b16 %v232
    %v527 = vunpack.c.h.b16 %v232
    %v528 = vunpack.c.l.b16 %v233
    %v529 = vunpack.c.h.b16 %v233
    %v530 = vunpack.c.l.b16 %v234
    %v531 = vunpack.c.l.b16 %v235
    %v532 = vunpack.c.h.b16 %v235
    %v533 = vunpack.c.l.b16 %v236
    %v534 = vunpack.c.h.b16 %v236
    %v535 = vunpack.c.l.b16 %v237
    %v536 = vunpack.c.h.b16 %v237
    %v537 = vunpack.c.l.b16 %v238
    %v538 = vunpack.c.l.b16 %v239
    %v539 = vunpack.c.h.b16 %v239
    %v540 = vunpack.c.l.b16 %v240
    %v541 = vunpack.c.h.b16 %v240
    %v542 = vunpack.c.l.b16 %v241
    %v543 = vunpack.c.h.b16 %v241
    %v544 = vunpack.c.l.b16 %v242
    %v545 = vunpack.c.l.b16 %v243
    %v546 = vunpack.c.h.b16 %v243
    %v547 = vunpack.c.l.b16 %v244
    %v548 = vunpack.c.h.b16 %v244
    %v549 = vunpack.c.l.b16 %v245
    %v550 = vunpack.c.h.b16 %v245
    %v551 = vunpack.c.l.b16 %v246
    %v552 = vunpack.c.l.b16 %v247
    %v553 = vunpack.c.h.b16 %v247
    %v554 = vunpack.c.l.b16 %v248
    %v555 = vunpack.c.h.b16 %v248
    %v556 = vunpack.c.l.b16 %v249
    %v557 = vunpack.c.h.b16 %v249
    %v558 = vunpack.c.l.b16 %v250
    %v559 = vunpack.c.l.b16 %v251
    %v560 = vunpack.c.h.b16 %v251
    %v561 = vunpack.c.l.b16 %v252
    %v562 = vunpack.c.h.b16 %v252
    %v563 = vunpack.c.l.b16 %v253
    %v564 = vunpack.c.h.b16 %v253
    %v565 = vunpack.c.l.b16 %v254
    %v566 = vunpack.c.l.b16 %v255
    %v567 = vunpack.c.h.b16 %v255
    %v568 = vunpack.c.l.b16 %v256
    %v569 = vunpack.c.h.b16 %v256
    %v570 = vunpack.c.l.b16 %v257
    %v571 = vunpack.c.h.b16 %v257
    %v572 = vunpack.c.l.b16 %v258
    %v573 = vunpack.c.l.b16 %v259
    %v574 = vunpack.c.h.b16 %v259
    %v575 = vunpack.c.l.b16 %v260
    %v576 = vunpack.c.h.b16 %v260
    %v577 = vunpack.c.l.b16 %v261
    %v578 = vunpack.c.h.b16 %v261
    %v579 = vunpack.c.l.b16 %v262
    %v580 = vunpack.c.l.b16 %v263
    %v581 = vunpack.c.h.b16 %v263
    %v582 = vunpack.c.l.b16 %v264
    %v583 = vunpack.c.h.b16 %v264
    %v584 = vunpack.c.l.b16 %v265
    %v585 = vunpack.c.h.b16 %v265
    %v586 = vunpack.c.l.b16 %v266
    %v587 = vunpack.c.l.b16 %v267
    %v588 = vunpack.c.h.b16 %v267
    %v589 = vunpack.c.l.b16 %v268
    %v590 = vunpack.c.h.b16 %v268
    %v591 = vunpack.c.l.b16 %v269
    %v592 = vunpack.c.h.b16 %v269
    %v593 = vunpack.c.l.b16 %v270
    %v594 = vunpack.c.l.b16 %v271
    %v595 = vunpack.c.h.b16 %v271
    %v596 = vunpack.c.l.b16 %v272
    %v597 = vunpack.c.h.b16 %v272
    %v598 = vunpack.c.l.b16 %v273
    %v599 = vunpack.c.h.b16 %v273
    %v600 = vunpack.c.l.b16 %v274
    %v601 = vunpack.c.l.b16 %v275
    %v602 = vunpack.c.h.b16 %v275
    %v603 = vunpack.c.l.b16 %v276
    %v604 = vunpack.c.h.b16 %v276
    %v605 = vunpack.c.l.b16 %v277
    %v606 = vunpack.c.h.b16 %v277
    %v607 = vunpack.c.l.b16 %v278
    %v608 = vunpack.c.l.b16 %v279
    %v609 = vunpack.c.h.b16 %v279
    %v610 = vunpack.c.l.b16 %v280
    %v611 = vunpack.c.h.b16 %v280
    %v612 = vunpack.c.l.b16 %v281
    %v613 = vunpack.c.h.b16 %v281
    %v614 = vunpack.c.l.b16 %v282
    %v615 = vunpack.c.l.b16 %v283
    %v616 = vunpack.c.h.b16 %v283
    %v617 = vunpack.c.l.b16 %v284
    %v618 = vunpack.c.h.b16 %v284
    %v619 = vunpack.c.l.b16 %v285
    %v620 = vunpack.c.h.b16 %v285
    %v621 = vunpack.c.l.b16 %v286
    %v622 = vunpack.c.l.b16 %v287
    %v623 = vunpack.c.h.b16 %v287
    %v624 = vunpack.c.l.b16 %v288
    %v625 = vunpack.c.h.b16 %v288
    %v626 = vunpack.c.l.b16 %v289
    %v627 = vunpack.c.h.b16 %v289
    %v628 = vunpack.c.l.b16 %v290
    %v629 = vunpack.c.l.b16 %v291
    %v630 = vunpack.c.h.b16 %v291
    %v631 = vunpack.c.l.b16 %v292
    %v632 = vunpack.c.h.b16 %v292
    %v633 = vunpack.c.l.b16 %v293
    %v634 = vunpack.c.h.b16 %v293
    %v635 = vunpack.c.l.b16 %v294
    %v636 = vunpack.c.l.b16 %v295
    %v637 = vunpack.c.h.b16 %v295
    %v638 = vunpack.c.l.b16 %v296
    %v639 = vunpack.c.h.b16 %v296
    %v640 = vunpack.c.l.b16 %v297
    %v641 = vunpack.c.h.b16 %v297
    %v642 = vunpack.c.l.b16 %v298
    %v643 = vunpack.c.l.b16 %v299
    %v644 = vunpack.c.h.b16 %v299
    %v645 = vunpack.c.l.b16 %v300
    %v646 = vunpack.c.h.b16 %v300
    %v647 = vunpack.c.l.b16 %v301
    %v648 = vunpack.c.h.b16 %v301
    %v649 = vunpack.c.l.b16 %v302
    %v650 = vunpack.c.l.b16 %v303
    %v651 = vunpack.c.h.b16 %v303
    %v652 = vunpack.c.l.b16 %v304
    %v653 = vunpack.c.h.b16 %v304
    %v654 = vunpack.c.l.b16 %v305
    %v655 = vunpack.c.h.b16 %v305
    %v656 = vunpack.c.l.b16 %v306
    %v657 = vunpack.c.l.b16 %v307
    %v658 = vunpack.c.h.b16 %v307
    %v659 = vunpack.c.l.b16 %v308
    %v660 = vunpack.c.h.b16 %v308
    %v661 = vunpack.c.l.b16 %v309
    %v662 = vunpack.c.h.b16 %v309
    %v663 = vunpack.c.l.b16 %v310
    %v664 = vunpack.c.l.b16 %v311
    %v665 = vunpack.c.h.b16 %v311
    %v666 = vunpack.c.l.b16 %v312
    %v667 = vunpack.c.h.b16 %v312
    %v668 = vunpack.c.l.b16 %v313
    %v669 = vunpack.c.h.b16 %v313
    %v670 = vunpack.c.l.b16 %v314
    %v671 = vunpack.c.l.b16 %v315
    %v672 = vunpack.c.h.b16 %v315
    %v673 = vunpack.c.l.b16 %v316
    %v674 = vunpack.c.h.b16 %v316
    %v675 = vunpack.c.l.b16 %v317
    %v676 = vunpack.c.h.b16 %v317
    %v677 = vunpack.c.l.b16 %v318
    %v678 = vunpack.c.l.b16 %v319
    %v679 = vunpack.c.h.b16 %v319
    %v680 = vunpack.c.l.b16 %v320
    %v681 = vunpack.c.h.b16 %v320
    %v682 = vunpack.c.l.b16 %v321
    %v683 = vunpack.c.h.b16 %v321
    %v684 = vunpack.c.l.b16 %v322
    %v685 = vunpack.c.l.b16 %v323
    %v686 = vunpack.c.h.b16 %v323
    %v687 = vunpack.c.l.b16 %v324
    %v688 = vunpack.c.h.b16 %v324
    %v689 = vunpack.c.l.b16 %v325
    %v690 = vunpack.c.h.b16 %v325
    %v691 = vunpack.c.l.b16 %v326
    %v692 = vunpack.c.l.b16 %v327
    %v693 = vunpack.c.h.b16 %v327
    %v694 = vunpack.c.l.b16 %v328
    %v695 = vunpack.c.h.b16 %v328
    %v696 = vunpack.c.l.b16 %v329
    %v697 = vunpack.c.h.b16 %v329
    %v698 = vunpack.c.l.b16 %v330
    %v699 = vunpack.c.l.b16 %v331
    %v700 = vunpack.c.h.b16 %v331
    %v701 = vunpack.c.l.b16 %v332
    %v702 = vunpack.c.h.b16 %v332
    %v703 = vunpack.c.l.b16 %v333
    %v704 = vunpack.c.h.b16 %v333
    %v705 = vunpack.c.l.b16 %v334
    %v706 = vunpack.c.l.b16 %v335
    %v707 = vunpack.c.h.b16 %v335
    %v708 = vunpack.c.l.b16 %v336
    %v709 = vunpack.c.h.b16 %v336
    %v710 = vunpack.c.l.b16 %v337
    %v711 = vunpack.c.h.b16 %v337
    %v712 = vunpack.c.l.b16 %v338
    %v713 = vunpack.c.l.b16 %v339
    %v714 = vunpack.c.h.b16 %v339
    %v715 = vunpack.c.l.b16 %v340
    %v716 = vunpack.c.h.b16 %v340
    %v717 = vunpack.c.l.b16 %v341
    %v718 = vunpack.c.h.b16 %v341
    %v719 = vunpack.c.l.b16 %v342
    %v720 = vunpack.c.l.b16 %v343
    %v721 = vunpack.c.h.b16 %v343
    %v722 = vunpack.c.l.b16 %v344
    %v723 = vunpack.c.h.b16 %v344
    %v724 = vunpack.c.l.b16 %v345
    %v725 = vunpack.c.h.b16 %v345
    %v726 = vunpack.c.l.b16 %v346
    %v727 = vunpack.c.l.b16 %v347
    %v728 = vunpack.c.h.b16 %v347
    %v729 = vunpack.c.l.b16 %v348
    %v730 = vunpack.c.h.b16 %v348
    %v731 = vunpack.c.l.b16 %v349
    %v732 = vunpack.c.h.b16 %v349
    %v733 = vunpack.c.l.b16 %v350
    %v734 = vunpack.c.l.b16 %v351
    %v735 = vunpack.c.h.b16 %v351
    %v736 = vunpack.c.l.b16 %v352
    %v737 = vunpack.c.h.b16 %v352
    %v738 = vunpack.c.l.b16 %v353
    %v739 = vunpack.c.h.b16 %v353
    %v740 = vunpack.c.l.b16 %v354
    %v741 = vunpack.c.l.b16 %v355
    %v742 = vunpack.c.h.b16 %v355
    %v743 = vunpack.c.l.b16 %v356
    %v744 = vunpack.c.h.b16 %v356
    %v745 = vunpack.c.l.b16 %v357
    %v746 = vunpack.c.h.b16 %v357
    %v747 = vunpack.c.l.b16 %v358
    %v748 = vpack.c.b16 %v531, %v524
    %v749 = vpack.c.b16 %v532, %v525
    %v750 = vpack.c.b16 %v533, %v526
    %v751 = vpack.c.b16 %v534, %v527
    %v752 = vpack.c.b16 %v535, %v528
    %v753 = vpack.c.b16 %v536, %v529
    %v754 = vpack.c.b16 %v537, %v530
    %v755 = vpack.c.b16 %v545, %v538
    %v756 = vpack.c.b16 %v546, %v539
    %v757 = vpack.c.b16 %v547, %v540
    %v758 = vpack.c.b16 %v548, %v541
    %v759 = vpack.c.b16 %v549, %v542
    %v760 = vpack.c.b16 %v550, %v543
    %v761 = vpack.c.b16 %v551, %v544
    %v762 = vpack.c.b16 %v559, %v552
    %v763 = vpack.c.b16 %v560, %v553
    %v764 = vpack.c.b16 %v561, %v554
    %v765 = vpack.c.b16 %v562, %v555
    %v766 = vpack.c.b16 %v563, %v556
    %v767 = vpack.c.b16 %v564, %v557
    %v768 = vpack.c.b16 %v565, %v558
    %v769 = vpack.c.b16 %v573, %v566
    %v770 = vpack.c.b16 %v574, %v567
    %v771 = vpack.c.b16 %v575, %v568
    %v772 = vpack.c.b16 %v576, %v569
    %v773 = vpack.c.b16 %v577, %v570
    %v774 = vpack.c.b16 %v578, %v571
    %v775 = vpack.c.b16 %v579, %v572
    %v776 = vpack.c.b16 %v587, %v580
    %v777 = vpack.c.b16 %v588, %v581
    %v778 = vpack.c.b16 %v589, %v582
    %v779 = vpack.c.b16 %v590, %v583
    %v780 = vpack.c.b16 %v591, %v584
    %v781 = vpack.c.b16 %v592, %v585
    %v782 = vpack.c.b16 %v593, %v586
    %v783 = vpack.c.b16 %v601, %v594
    %v784 = vpack.c.b16 %v602, %v595
    %v785 = vpack.c.b16 %v603, %v596
    %v786 = vpack.c.b16 %v604, %v597
    %v787 = vpack.c.b16 %v605, %v598
    %v788 = vpack.c.b16 %v606, %v599
    %v789 = vpack.c.b16 %v607, %v600
    %v790 = vpack.c.b16 %v615, %v608
    %v791 = vpack.c.b16 %v616, %v609
    %v792 = vpack.c.b16 %v617, %v610
    %v793 = vpack.c.b16 %v618, %v611
    %v794 = vpack.c.b16 %v619, %v612
    %v795 = vpack.c.b16 %v620, %v613
    %v796 = vpack.c.b16 %v621, %v614
    %v797 = vpack.c.b16 %v629, %v622
    %v798 = vpack.c.b16 %v630, %v623
    %v799 = vpack.c.b16 %v631, %v624
    %v800 = vpack.c.b16 %v632, %v625
    %v801 = vpack.c.b16 %v633, %v626
    %v802 = vpack.c.b16 %v634, %v627
    %v803 = vpack.c.b16 %v635, %v628
    %v804 = vpack.c.b16 %v643, %v636
    %v805 = vpack.c.b16 %v644, %v637
    %v806 = vpack.c.b16 %v645, %v638
    %v807 = vpack.c.b16 %v646, %v639
    %v808 = vpack.c.b16 %v647, %v640
    %v809 = vpack.c.b16 %v648, %v641
    %v810 = vpack.c.b16 %v649, %v642
    %v811 = vpack.c.b16 %v657, %v650
    %v812 = vpack.c.b16 %v658, %v651
    %v813 = vpack.c.b16 %v659, %v652
    %v814 = vpack.c.b16 %v660, %v653
    %v815 = vpack.c.b16 %v661, %v654
    %v816 = vpack.c.b16 %v662, %v655
    %v817 = vpack.c.b16 %v663, %v656
    %v818 = vpack.c.b16 %v671, %v664
    %v819 = vpack.c.b16 %v672, %v665
    %v820 = vpack.c.b16 %v673, %v666
    %v821 = vpack.c.b16 %v674, %v667
    %v822 = vpack.c.b16 %v675, %v668
    %v823 = vpack.c.b16 %v676, %v669
    %v824 = vpack.c.b16 %v677, %v670
    %v825 = vpack.c.b16 %v685, %v678
    %v826 = vpack.c.b16 %v686, %v679
    %v827 = vpack.c.b16 %v687, %v680
    %v828 = vpack.c.b16 %v688, %v681
    %v829 = vpack.c.b16 %v689, %v682
    %v830 = vpack.c.b16 %v690, %v683
    %v831 = vpack.c.b16 %v691, %v684
    %v832 = vpack.c.b16 %v699, %v692
    %v833 = vpack.c.b16 %v700, %v693
    %v834 = vpack.c.b16 %v701, %v694
    %v835 = vpack.c.b16 %v702, %v695
    %v836 = vpack.c.b16 %v703, %v696
    %v837 = vpack.c.b16 %v704, %v697
    %v838 = vpack.c.b16 %v705, %v698
    %v839 = vpack.c.b16 %v713, %v706
    %v840 = vpack.c.b16 %v714, %v707
    %v841 = vpack.c.b16 %v715, %v708
    %v842 = vpack.c.b16 %v716, %v709
    %v843 = vpack.c.b16 %v717, %v710
    %v844 = vpack.c.b16 %v718, %v711
    %v845 = vpack.c.b16 %v719, %v712
    %v846 = vpack.c.b16 %v727, %v720
    %v847 = vpack.c.b16 %v728, %v721
    %v848 = vpack.c.b16 %v729, %v722
    %v849 = vpack.c.b16 %v730, %v723
    %v850 = vpack.c.b16 %v731, %v724
    %v851 = vpack.c.b16 %v732, %v725
    %v852 = vpack.c.b16 %v733, %v726
    %v853 = vpack.c.b16 %v741, %v734
    %v854 = vpack.c.b16 %v742, %v735
    %v855 = vpack.c.b16 %v743, %v736
    %v856 = vpack.c.b16 %v744, %v737
    %v857 = vpack.c.b16 %v745, %v738
    %v858 = vpack.c.b16 %v746, %v739
    %v859 = vpack.c.b16 %v747, %v740
    %972 = vmatprep.subr.bf16.mxu0 %v749
    %973 = vmatpush1.bf16.msra.mxu0 %v748
    %974 = vmatprep.subr.bf16.mxu0 %v756
    %975 = vmatpush1.bf16.msra.mxu0 %v755
    %976 = vmatprep.subr.bf16.mxu0 %v763
    %977 = vmatpush1.bf16.msra.mxu0 %v762
    %978 = vmatprep.subr.bf16.mxu0 %v770
    %979 = vmatpush1.bf16.msra.mxu0 %v769
    %980 = vmatprep.subr.bf16.mxu0 %v777
    %981 = vmatpush1.bf16.msra.mxu0 %v776
    %982 = vmatprep.subr.bf16.mxu0 %v784
    %983 = vmatpush1.bf16.msra.mxu0 %v783
    %984 = vmatprep.subr.bf16.mxu0 %v791
    %985 = vmatpush1.bf16.msra.mxu0 %v790
    %986 = vmatprep.subr.bf16.mxu0 %v798
    %987 = vmatpush1.bf16.msra.mxu0 %v797
    %988 = vmatprep.subr.bf16.mxu0 %v805
    %989 = vmatpush1.bf16.msra.mxu0 %v804
    %990 = vmatprep.subr.bf16.mxu0 %v812
    %991 = vmatpush1.bf16.msra.mxu0 %v811
    %992 = vmatprep.subr.bf16.mxu0 %v819
    %993 = vmatpush1.bf16.msra.mxu0 %v818
    %994 = vmatprep.subr.bf16.mxu0 %v826
    %995 = vmatpush1.bf16.msra.mxu0 %v825
    %996 = vmatprep.subr.bf16.mxu0 %v833
    %997 = vmatpush1.bf16.msra.mxu0 %v832
    %998 = vmatprep.subr.bf16.mxu0 %v840
    %999 = vmatpush1.bf16.msra.mxu0 %v839
    %1000 = vmatprep.subr.bf16.mxu0 %v847
    %1001 = vmatpush1.bf16.msra.mxu0 %v846
    %1002 = vmatprep.subr.bf16.mxu0 %v854
    %1003 = vmatpush1.bf16.msra.mxu0 %v853
    %1004 = vmatprep.mubr.bf16.mxu0 %v230
    %1005 = vmatmul.mubr.bf16.gmra.mrb[0].mxu0 %v229
    %v1006 = vpop.f32.mrb[0].mxu0
    %v1007 = vadd.f32 %v364, %v1006
    %v1008 = vpop.f32.mrb[0].mxu0
    %v1009 = vadd.f32 %v368, %v1008
    %v1010 = vpop.f32.mrb[0].mxu0
    %v1011 = vadd.f32 %v364, %v1010
    %v1012 = vpop.f32.mrb[0].mxu0
    %v1013 = vadd.f32 %v368, %v1012
    %1014 = vdwg.mxu0
    %1015 = vmatprep.subr.bf16.mxu0 %v751
    %1016 = vmatpush1.bf16.msra.mxu0 %v750
    %1017 = vmatprep.subr.bf16.mxu0 %v758
    %1018 = vmatpush1.bf16.msra.mxu0 %v757
    %1019 = vmatprep.subr.bf16.mxu0 %v765
    %1020 = vmatpush1.bf16.msra.mxu0 %v764
    %1021 = vmatprep.subr.bf16.mxu0 %v772
    %1022 = vmatpush1.bf16.msra.mxu0 %v771
    %1023 = vmatprep.subr.bf16.mxu0 %v779
    %1024 = vmatpush1.bf16.msra.mxu0 %v778
    %1025 = vmatprep.subr.bf16.mxu0 %v786
    %1026 = vmatpush1.bf16.msra.mxu0 %v785
    %1027 = vmatprep.subr.bf16.mxu0 %v793
    %1028 = vmatpush1.bf16.msra.mxu0 %v792
    %1029 = vmatprep.subr.bf16.mxu0 %v800
    %1030 = vmatpush1.bf16.msra.mxu0 %v799
    %1031 = vmatprep.subr.bf16.mxu0 %v807
    %1032 = vmatpush1.bf16.msra.mxu0 %v806
    %1033 = vmatprep.subr.bf16.mxu0 %v814
    %1034 = vmatpush1.bf16.msra.mxu0 %v813
    %1035 = vmatprep.subr.bf16.mxu0 %v821
    %1036 = vmatpush1.bf16.msra.mxu0 %v820
    %1037 = vmatprep.subr.bf16.mxu0 %v828
    %1038 = vmatpush1.bf16.msra.mxu0 %v827
    %1039 = vmatprep.subr.bf16.mxu0 %v835
    %1040 = vmatpush1.bf16.msra.mxu0 %v834
    %1041 = vmatprep.subr.bf16.mxu0 %v842
    %1042 = vmatpush1.bf16.msra.mxu0 %v841
    %1043 = vmatprep.subr.bf16.mxu0 %v849
    %1044 = vmatpush1.bf16.msra.mxu0 %v848
    %1045 = vmatprep.subr.bf16.mxu0 %v856
    %1046 = vmatpush1.bf16.msra.mxu0 %v855
    %1047 = vmatprep.mubr.bf16.mxu0 %v230
    %1048 = vmatmul.mubr.bf16.gmra.mrb[0].mxu0 %v229
    %v1049 = vpop.f32.mrb[0].mxu0
    %v1050 = vadd.f32 %v372, %v1049
    %v1051 = vpop.f32.mrb[0].mxu0
    %v1052 = vadd.f32 %v376, %v1051
    %v1053 = vpop.f32.mrb[0].mxu0
    %v1054 = vadd.f32 %v372, %v1053
    %v1055 = vpop.f32.mrb[0].mxu0
    %v1056 = vadd.f32 %v376, %v1055
    %1057 = vdwg.mxu0
    %1058 = vmatprep.subr.bf16.mxu0 %v753
    %1059 = vmatpush1.bf16.msra.mxu0 %v752
    %1060 = vmatprep.subr.bf16.mxu0 %v760
    %1061 = vmatpush1.bf16.msra.mxu0 %v759
    %1062 = vmatprep.subr.bf16.mxu0 %v767
    %1063 = vmatpush1.bf16.msra.mxu0 %v766
    %1064 = vmatprep.subr.bf16.mxu0 %v774
    %1065 = vmatpush1.bf16.msra.mxu0 %v773
    %1066 = vmatprep.subr.bf16.mxu0 %v781
    %1067 = vmatpush1.bf16.msra.mxu0 %v780
    %1068 = vmatprep.subr.bf16.mxu0 %v788
    %1069 = vmatpush1.bf16.msra.mxu0 %v787
    %1070 = vmatprep.subr.bf16.mxu0 %v795
    %1071 = vmatpush1.bf16.msra.mxu0 %v794
    %1072 = vmatprep.subr.bf16.mxu0 %v802
    %1073 = vmatpush1.bf16.msra.mxu0 %v801
    %1074 = vmatprep.subr.bf16.mxu0 %v809
    %1075 = vmatpush1.bf16.msra.mxu0 %v808
    %1076 = vmatprep.subr.bf16.mxu0 %v816
    %1077 = vmatpush1.bf16.msra.mxu0 %v815
    %1078 = vmatprep.subr.bf16.mxu0 %v823
    %1079 = vmatpush1.bf16.msra.mxu0 %v822
    %1080 = vmatprep.subr.bf16.mxu0 %v830
    %1081 = vmatpush1.bf16.msra.mxu0 %v829
    %1082 = vmatprep.subr.bf16.mxu0 %v837
    %1083 = vmatpush1.bf16.msra.mxu0 %v836
    %1084 = vmatprep.subr.bf16.mxu0 %v844
    %1085 = vmatpush1.bf16.msra.mxu0 %v843
    %1086 = vmatprep.subr.bf16.mxu0 %v851
    %1087 = vmatpush1.bf16.msra.mxu0 %v850
    %1088 = vmatprep.subr.bf16.mxu0 %v858
    %1089 = vmatpush1.bf16.msra.mxu0 %v857
    %1090 = vmatprep.mubr.bf16.mxu0 %v230
    %1091 = vmatmul.mubr.bf16.gmra.mrb[0].mxu0 %v229
    %v1092 = vpop.f32.mrb[0].mxu0
    %v1093 = vadd.f32 %v380, %v1092
    %v1094 = vpop.f32.mrb[0].mxu0
    %v1095 = vadd.f32 %v384, %v1094
    %v1096 = vpop.f32.mrb[0].mxu0
    %v1097 = vadd.f32 %v380, %v1096
    %v1098 = vpop.f32.mrb[0].mxu0
    %v1099 = vadd.f32 %v384, %v1098
    %1100 = vdwg.mxu0
    %1101 = vmatprep.subr.bf16.mxu0 0
    %1102 = vmatpush1.bf16.msra.mxu0 %v754
    %1103 = vmatprep.subr.bf16.mxu0 0
    %1104 = vmatpush1.bf16.msra.mxu0 %v761
    %1105 = vmatprep.subr.bf16.mxu0 0
    %1106 = vmatpush1.bf16.msra.mxu0 %v768
    %1107 = vmatprep.subr.bf16.mxu0 0
    %1108 = vmatpush1.bf16.msra.mxu0 %v775
    %1109 = vmatprep.subr.bf16.mxu0 0
    %1110 = vmatpush1.bf16.msra.mxu0 %v782
    %1111 = vmatprep.subr.bf16.mxu0 0
    %1112 = vmatpush1.bf16.msra.mxu0 %v789
    %1113 = vmatprep.subr.bf16.mxu0 0
    %1114 = vmatpush1.bf16.msra.mxu0 %v796
    %1115 = vmatprep.subr.bf16.mxu0 0
    %1116 = vmatpush1.bf16.msra.mxu0 %v803
    %1117 = vmatprep.subr.bf16.mxu0 0
    %1118 = vmatpush1.bf16.msra.mxu0 %v810
    %1119 = vmatprep.subr.bf16.mxu0 0
    %1120 = vmatpush1.bf16.msra.mxu0 %v817
    %1121 = vmatprep.subr.bf16.mxu0 0
    %1122 = vmatpush1.bf16.msra.mxu0 %v824
    %1123 = vmatprep.subr.bf16.mxu0 0
    %1124 = vmatpush1.bf16.msra.mxu0 %v831
    %1125 = vmatprep.subr.bf16.mxu0 0
    %1126 = vmatpush1.bf16.msra.mxu0 %v838
    %1127 = vmatprep.subr.bf16.mxu0 0
    %1128 = vmatpush1.bf16.msra.mxu0 %v845
    %1129 = vmatprep.subr.bf16.mxu0 0
    %1130 = vmatpush1.bf16.msra.mxu0 %v852
    %1131 = vmatprep.subr.bf16.mxu0 0
    %1132 = vmatpush1.bf16.msra.mxu0 %v859
    %1133 = vmatprep.mubr.bf16.mxu0 %v230
    %1134 = vmatmul.mubr.bf16.gmra.mrb[0].mxu0 %v229
    %v1135 = vpop.f32.mrb[0].mxu0
    %v1136 = vadd.f32 %v388, %v1135
    %v1137 = vpop.f32.mrb[0].mxu0
    %v1138 = vpop.f32.mrb[0].mxu0
    %v1139 = vadd.f32 %v388, %v1138
    %v1140 = vpop.f32.mrb[0].mxu0
    %1141 = vdwg.mxu0
    %v1142 = vtanh.pop %v1007
    %v1143 = vtanh.pop %v1009
    %v1144 = vtanh.pop %v1050
    %v1145 = vtanh.pop %v1052
    %v1146 = vtanh.pop %v1093
    %v1147 = vtanh.pop %v1095
    %v1148 = vtanh.pop %v1136
    %v1149 = vtanh.pop %v1011
    %v1150 = vtanh.pop %v1013
    %v1151 = vtanh.pop %v1054
    %v1152 = vtanh.pop %v1056
    %v1153 = vtanh.pop %v1097
    %v1154 = vtanh.pop %v1099
    %v1155 = vtanh.pop %v1139
    %1156 = vst [vmem:[#allocation8] sm:$0xff] %v1142
    %1157 = vst [vmem:[#allocation8 + $0x8] sm:$0xff] %v1143
    %1158 = vst [vmem:[#allocation8 + $0x10] sm:$0xff] %v1144
    %1159 = vst [vmem:[#allocation8 + $0x18] sm:$0xff] %v1145
    %1160 = vst [vmem:[#allocation8 + $0x20] sm:$0xff] %v1146
    %1161 = vst [vmem:[#allocation8 + $0x28] sm:$0xff] %v1147
    %1162 = vst [vmem:[#allocation8 + $0x30] sm:$0xff] %v1148
    %1163 = vst [vmem:[#allocation8 + $0x38] sm:$0xff] %v1149
    %1164 = vst [vmem:[#allocation8 + $0x40] sm:$0xff] %v1150
    %1165 = vst [vmem:[#allocation8 + $0x48] sm:$0xff] %v1151
    %1166 = vst [vmem:[#allocation8 + $0x50] sm:$0xff] %v1152
    %1167 = vst [vmem:[#allocation8 + $0x58] sm:$0xff] %v1153
    %1168 = vst [vmem:[#allocation8 + $0x60] sm:$0xff] %v1154
    %1169 = vst [vmem:[#allocation8 + $0x68] sm:$0xff] %v1155
    // Predicated region
    $region34: #{tpu_custom_call.1} parent=1 // pred_check
      _
    $region35: #{tpu_custom_call.1} parent=1 // pred_check_branch
      %1171 = sbr.rel (0) target = $region37
    $region36: #{tpu_custom_call.1} parent=1 // pred_region
      %s1173 = ssub.s32 1792, 1792
      %1174 = vsyncadd [#allocation4], %s1173
      %s1175 = sshll.u32 [#allocation8], 4
      %s1176 = int_to_ptr.vmem [resolvable:$true] %s1175
      %1181 = dma.vmem_to_hbm [thread:$0]  %s1176, 1792, %s5, [#allocation4], 896, 896, 56
    $region37: #{tpu_custom_call.1} parent=1 // pred_fallthru
      _
    // Predicated region
    $region38: #{tpu_custom_call.1} parent=1 // pred_check
      _
    $region39: #{tpu_custom_call.1} parent=1 // pred_check_branch
      %1183 = sbr.rel (0) target = $region41
    $region40: #{tpu_custom_call.1} parent=1 // pred_region
      %1184 = dma.done [#allocation4], 1792
    $region41: #{tpu_custom_call.1} parent=1 // pred_fallthru
      _
    %1185 = vsyncpa [#allocation3], 1
    %1186 = vsyncpa [#allocation6], 1
    %1187 = vsyncpa [#allocation4], 1

</llo_original>
